<compile_context>
chip_gen: v6e
topology: v6e:2x2x1
jax: 0.10.0
libtpu: 0.0.40
codegen_flags: <defaults>
</compile_context>

<pallas_src>
import functools

import jax
import jax.numpy as jnp
from jax.experimental import pallas as pl
from jax.experimental.pallas import tpu as pltpu


def _round_up(x, m):
    return ((x + m - 1) // m) * m


def _tpu_generation():
    """Best-effort TPU generation (5/6/7...); defaults to 6 if unknown."""
    try:
        kind = jax.devices()[0].device_kind.lower()
    except Exception:
        return 6
    for g in (7, 6, 5, 4):
        if f"v{g}" in kind:
            return g
    return 6


def _vmem_capacity_bytes(gen):
    try:
        info = pltpu.get_tpu_info()
        cap = getattr(info, "vmem_capacity_bytes", None)
        if cap:
            return int(cap)
    except Exception:
        pass
    # v7x: 64 MiB per TensorCore; v5e/v6e: 128 MiB.
    return (64 << 20) if gen >= 7 else (128 << 20)


def _pick_tile_i(inter, target):
    """Largest multiple of 128 that divides `inter` and is <= target.

    Using a divisor of the intermediate dim avoids rewriting the (huge) weight
    matrices in HBM on every call just to pad them.  Falls back to a padded
    tile only if no 128-multiple divisor exists.
    """
    best = None
    t = 128
    limit = min(target, inter)
    while t <= limit:
        if inter % t == 0:
            best = t
        t += 128
    if best is not None:
        return best
    return min(_round_up(inter, 128), _round_up(target, 128))


def _mlp_kernel(x_ref, w1_ref, b1_ref, w2_ref, b2_ref, o_ref, acc_ref, *,
                tile_i, act_bf16):
    """One (TM, H) row tile x one TI chunk of the intermediate dimension.

    x_ref:  (TM, H)       row tile (resident across the TI reduction axis)
    w1_ref: (H,  TI)      fc1 weight chunk (streamed / double-buffered)
    b1_ref: (1,  I_pad)   fc1 bias, VMEM-resident; sliced per TI chunk
    w2_ref: (TI, H)       fc2 weight chunk (streamed / double-buffered)
    b2_ref: (1,  H)       fc2 bias (constant block)
    o_ref:  (TM, H)       output tile (written once, on the last TI step)
    acc_ref:(TM, H) f32   VMEM accumulator for the fc2 reduction over I
    """
    j = pl.program_id(1)

    @pl.when(j == 0)
    def _():
        acc_ref[...] = jnp.zeros_like(acc_ref)

    # fc1 chunk on the MXU, f32 accumulation.
    h = jnp.dot(x_ref[...], w1_ref[...], preferred_element_type=jnp.float32)
    start = pl.multiple_of(j * tile_i, tile_i)
    h = h + b1_ref[:, pl.ds(start, tile_i)].astype(jnp.float32)

    # SiLU.  bf16 on v6e/v7x (bf16 VPU/EUP: half the VALU elements, ~2x EUP
    # throughput; numerics already bounded by the bf16 cast into fc2).
    # f32 on v5e (no bf16 VPU/EUP).
    if act_bf16:
        h = h.astype(jnp.bfloat16)
    h = h * jax.nn.sigmoid(h)

    # Partial fc2: accumulate (TM, TI) @ (TI, H) into the f32 accumulator.
    acc_ref[...] += jnp.dot(h.astype(w2_ref.dtype), w2_ref[...],
                            preferred_element_type=jnp.float32)

    @pl.when(j == pl.num_programs(1) - 1)
    def _():
        o_ref[...] = (acc_ref[...] + b2_ref[...].astype(jnp.float32)
                      ).astype(o_ref.dtype)


def llama4_text_mlp(x, w1t, b1, w2t, b2, *, tile_m=None, tile_i=None,
                    vmem_limit_bytes=None, weight_buffers=2):
    """Fused Llama4TextMLP forward.

    x:   (batch, seq, hidden)
    w1t: (hidden, intermediate)   == fc1.weight.T  (pre-transposed ONCE at load)
    b1:  (intermediate,)
    w2t: (intermediate, hidden)   == fc2.weight.T  (pre-transposed ONCE at load)
    b2:  (hidden,)
    weight_buffers: >2 requests deeper pipelining of the weight streams
                    (useful on v7x / decode); default keeps double-buffering.
    """
    batch, seq, hidden = x.shape
    inter = w1t.shape[1]
    assert w1t.shape == (hidden, inter), w1t.shape
    assert w2t.shape == (inter, hidden), w2t.shape
    M = batch * seq

    gen = _tpu_generation()
    vmem_cap = _vmem_capacity_bytes(gen)

    x_item = jnp.dtype(x.dtype).itemsize
    w1_item = jnp.dtype(w1t.dtype).itemsize
    w2_item = jnp.dtype(w2t.dtype).itemsize
    b1_item = jnp.dtype(b1.dtype).itemsize
    b2_item = jnp.dtype(b2.dtype).itemsize

    # Sublane pack granularity for the M (row) tile: 8 f32 / 16 bf16 / 32 int8.
    m_gran = 8 if x_item >= 4 else (16 if x_item == 2 else 32)
    auto_tiles = tile_m is None and tile_i is None

    # ---- intermediate-dim tile --------------------------------------------
    if tile_i is None:
        # v5e/v6e (128 MiB VMEM): big TI -> fewer f32-accumulator RMW passes
        # and fewer grid steps.  v7x (64 MiB): keep TI moderate.
        ti_target = 512 if gen >= 7 else 1024
        if M <= 128:  # decode / tiny prefill: fewer, larger weight DMAs
            ti_target = 1024 if gen >= 7 else 2048
        tile_i = _pick_tile_i(inter, ti_target)

    # ---- M (row) tile -------------------------------------------------------
    if tile_m is None:
        # v6e crossover is ~700 flops/weight-byte -> TM up to 512.
        # v7x: TM=256 is roughly DMA/compute balanced and fits 64 MiB VMEM.
        tm_cap = 256 if gen >= 7 else 512
        tile_m = min(tm_cap, _round_up(M, m_gran))
        # Guarantee >=2 M tiles when there's enough work so the "parallel"
        # M axis actually feeds both TensorCores.
        if M >= max(32, 2 * m_gran) and pl.cdiv(M, tile_m) < 2:
            tile_m = _round_up(pl.cdiv(M, 2), m_gran)

    i_pad = _round_up(inter, tile_i)

    def _footprint(tm, ti, ipad):
        return (2 * tm * hidden * x_item          # x tile (double buffered)
                + 2 * hidden * ti * w1_item       # fc1 weight chunk
                + 2 * ti * hidden * w2_item       # fc2 weight chunk
                + 2 * ipad * b1_item              # resident fc1 bias
                + 2 * hidden * b2_item            # fc2 bias
                + 2 * tm * hidden * x_item        # output tile
                + tm * hidden * 4                 # f32 accumulator
                + tm * ti * 4)                    # live activation chunk

    # ---- VMEM safety: shrink auto tiles if the pipeline footprint overshoots
    if auto_tiles:
        budget = int(0.85 * vmem_cap)
        while _footprint(tile_m, tile_i, i_pad) * 1.3 > budget:
            if tile_i > 256 and inter % (tile_i // 2) == 0:
                tile_i //= 2
            elif tile_m > 2 * m_gran:
                tile_m = _round_up(tile_m // 2, m_gran)
            else:
                break
            i_pad = _round_up(inter, tile_i)

    m_pad = _round_up(M, tile_m)

    # ---- operand prep -------------------------------------------------------
    x2d = x.reshape(M, hidden)
    if m_pad != M:
        x2d = jnp.pad(x2d, ((0, m_pad - M), (0, 0)))
    if i_pad != inter:
        # Zero-padding the intermediate dim is exact: silu(0 + 0) == 0 and the
        # padded W2 rows are zero, so they contribute nothing to fc2.
        # TODO(synk): pre-pad the weights once at parameter-load time (like the
        # pre-transpose) so this per-call HBM rewrite never triggers.
        w1t = jnp.pad(w1t, ((0, 0), (0, i_pad - inter)))
        b1 = jnp.pad(b1, (0, i_pad - inter))
        w2t = jnp.pad(w2t, ((0, i_pad - inter), (0, 0)))

    b1_2d = b1.reshape(1, i_pad)
    b2_2d = b2.reshape(1, hidden)

    grid = (m_pad // tile_m, i_pad // tile_i)

    # ---- VMEM budget, clamped to the actual device capacity -----------------
    if vmem_limit_bytes is None:
        vmem_limit_bytes = int(_footprint(tile_m, tile_i, i_pad) * 1.3) + (4 << 20)
    vmem_limit_bytes = min(vmem_limit_bytes, int(0.88 * vmem_cap))

    # ---- scheduling hint for XLA around the custom call ---------------------
    cost = pl.CostEstimate(
        flops=4 * M * hidden * inter,
        transcendentals=M * inter,
        bytes_accessed=(M * hidden * x_item
                        + hidden * inter * w1_item
                        + inter * hidden * w2_item
                        + inter * b1_item
                        + hidden * b2_item
                        + M * hidden * x_item),
    )

    # bf16 SiLU only where the VPU/EUP have bf16 paths (v6e / v7x).
    act_bf16 = (jnp.dtype(x.dtype) == jnp.bfloat16) and gen >= 6
    kernel = functools.partial(_mlp_kernel, tile_i=tile_i, act_bf16=act_bf16)

    def _weight_spec(shape, index_map):
        if weight_buffers and weight_buffers > 2:
            try:
                return pl.BlockSpec(shape, index_map,
                                    pipeline_mode=pl.Buffered(weight_buffers))
            except Exception:
                pass  # fall back to default double-buffering
        return pl.BlockSpec(shape, index_map)

    out2d = pl.pallas_call(
        kernel,
        out_shape=jax.ShapeDtypeStruct((m_pad, hidden), x.dtype),
        grid_spec=pltpu.PrefetchScalarGridSpec(
            num_scalar_prefetch=0,
            grid=grid,
            in_specs=[
                pl.BlockSpec((tile_m, hidden), lambda i, j: (i, 0)),     # x tile
                _weight_spec((hidden, tile_i), lambda i, j: (0, j)),     # W1^T
                pl.BlockSpec((1, i_pad), lambda i, j: (0, 0)),           # b1 (resident)
                _weight_spec((tile_i, hidden), lambda i, j: (j, 0)),     # W2^T
                pl.BlockSpec((1, hidden), lambda i, j: (0, 0)),          # b2
            ],
            out_specs=pl.BlockSpec((tile_m, hidden), lambda i, j: (i, 0)),
            scratch_shapes=[pltpu.VMEM((tile_m, hidden), jnp.float32)],
        ),
        compiler_params=pltpu.CompilerParams(
            dimension_semantics=("parallel", "arbitrary"),
            vmem_limit_bytes=vmem_limit_bytes,
        ),
        cost_estimate=cost,
    )(x2d, w1t, b1_2d, w2t, b2_2d)

    if m_pad != M:
        out2d = out2d[:M]
    return out2d.reshape(batch, seq, hidden)


def _reference(x, w1t, b1, w2t, b2):
    h = jnp.einsum("bsh,hi->bsi", x, w1t) + b1
    h = h * jax.nn.sigmoid(h)
    return jnp.einsum("bsi,ih->bsh", h, w2t) + b2


if __name__ == "__main__":
    # Small shapes consistent with the module's forward (toy config).
    batch, seq = 2, 8
    hidden_size = 128
    intermediate_size = 256

    key = jax.random.PRNGKey(0)
    kx, kw1, kb1, kw2, kb2 = jax.random.split(key, 5)

    x = jax.random.normal(kx, (batch, seq, hidden_size), dtype=jnp.float32)
    # nn.Linear layouts: fc1.weight (I, H), fc2.weight (H, I); biases (I,), (H,).
    w1 = jax.random.normal(kw1, (intermediate_size, hidden_size), jnp.float32) * 0.02
    b1 = jax.random.normal(kb1, (intermediate_size,), jnp.float32) * 0.02
    w2 = jax.random.normal(kw2, (hidden_size, intermediate_size), jnp.float32) * 0.02
    b2 = jax.random.normal(kb2, (hidden_size,), jnp.float32) * 0.02

    # Pre-transpose once (done at parameter-load time in real use).
    w1t = w1.T          # (H, I)
    w2t = w2.T          # (I, H)

    # --- f32 path, auto (generation-aware) tiles ------------------------------
    out = jax.block_until_ready(llama4_text_mlp(x, w1t, b1, w2t, b2))
    ref = _reference(x, w1t, b1, w2t, b2)
    assert out.shape == (batch, seq, hidden_size)
    assert jnp.allclose(out, ref, atol=1e-5, rtol=1e-5), "f32 mismatch vs reference"

    # --- f32 path, forced multi-step reduction + ragged-M padding --------------
    x_ragged = x[:, :7, :]                       # M = 14, pads to 16
    out2 = jax.block_until_ready(
        llama4_text_mlp(x_ragged, w1t, b1, w2t, b2, tile_m=8, tile_i=128))
    ref2 = _reference(x_ragged, w1t, b1, w2t, b2)
    assert jnp.allclose(out2, ref2, atol=1e-5, rtol=1e-5), "ragged/tiled mismatch"

    # --- bf16 params path (MXU-friendly dtype; f32 accumulation inside) --------
    xb = x.astype(jnp.bfloat16)
    w1tb, b1b = w1t.astype(jnp.bfloat16), b1.astype(jnp.bfloat16)
    w2tb, b2b = w2t.astype(jnp.bfloat16), b2.astype(jnp.bfloat16)
    out_bf = jax.block_until_ready(llama4_text_mlp(xb, w1tb, b1b, w2tb, b2b))
    ref_bf = _reference(xb.astype(jnp.float32), w1tb.astype(jnp.float32),
                        b1b.astype(jnp.float32), w2tb.astype(jnp.float32),
                        b2b.astype(jnp.float32))
    assert jnp.allclose(out_bf.astype(jnp.float32), ref_bf, atol=2e-2, rtol=2e-2), \
        "bf16 mismatch vs reference"

    print("KERNEL_OK")
</pallas_src>

<mosaic_0001>
module attributes {stable_mosaic.version = 11 : i64} {
  func.func @_mlp_kernel(%arg0: i32, %arg1: i32, %arg2: memref<16x128xf32, #tpu.memory_space<vmem>>, %arg3: memref<128x256xf32, #tpu.memory_space<vmem>>, %arg4: memref<1x256xf32, #tpu.memory_space<vmem>>, %arg5: memref<256x128xf32, #tpu.memory_space<vmem>>, %arg6: memref<1x128xf32, #tpu.memory_space<vmem>>, %arg7: memref<16x128xf32, #tpu.memory_space<vmem>>, %arg8: memref<16x128xf32, #tpu.memory_space<vmem>>) attributes {dimension_semantics = [#tpu.dimension_semantics<parallel>, #tpu.dimension_semantics<arbitrary>], iteration_bounds = array<i64: 1, 1>, scalar_prefetch = 0 : i64, scratch_operands = 1 : i64, tpu.core_type = #tpu.core_type<tc>, window_params = [{transform_indices = @transform_0, window_bounds = array<i64: 16, 128>}, {transform_indices = @transform_1, window_bounds = array<i64: 128, 256>}, {pipeline_mode = #tpu.pipeline_mode<synchronous>, transform_indices = @transform_2, window_bounds = array<i64: 1, 256>}, {transform_indices = @transform_3, window_bounds = array<i64: 256, 128>}, {pipeline_mode = #tpu.pipeline_mode<synchronous>, transform_indices = @transform_4, window_bounds = array<i64: 1, 128>}, {transform_indices = @transform_5, window_bounds = array<i64: 16, 128>}]} {
    %c0_i32 = arith.constant 0 : i32
    %0 = arith.cmpi eq, %arg1, %c0_i32 : i32
    %1 = arith.extui %0 : i1 to i32
    %c0_i32_0 = arith.constant 0 : i32
    %2 = arith.cmpi ne, %1, %c0_i32_0 : i32
    scf.if %2 {
      %cst_15 = arith.constant 0.000000e+00 : f32
      %26 = vector.broadcast %cst_15 : f32 to vector<16x128xf32>
      %c0_16 = arith.constant 0 : index
      %c0_17 = arith.constant 0 : index
      %27 = vector.load %arg8[%c0_16, %c0_17] : memref<16x128xf32, #tpu.memory_space<vmem>>, vector<16x128xf32>
      tpu.vector_store %arg8[%c0_16, %c0_17], %26 {strides = array<i32>} : memref<16x128xf32, #tpu.memory_space<vmem>>, vector<16x128xf32>,
    } else {
    }
    %c0 = arith.constant 0 : index
    %c0_1 = arith.constant 0 : index
    %3 = vector.load %arg2[%c0, %c0_1] : memref<16x128xf32, #tpu.memory_space<vmem>>, vector<16x128xf32>
    %c0_2 = arith.constant 0 : index
    %c0_3 = arith.constant 0 : index
    %4 = vector.load %arg3[%c0_2, %c0_3] : memref<128x256xf32, #tpu.memory_space<vmem>>, vector<128x256xf32>
    %cst = arith.constant dense<0.000000e+00> : vector<16x256xf32>
    %5 = tpu.matmul %3, %4, %cst {dimension_numbers = #tpu.dot_dimension_numbers<[1], [0], [0], [1], [0, 0, 1, 1], [], []>} : vector<16x128xf32>, vector<128x256xf32>, vector<16x256xf32> -> vector<16x256xf32>
    %c256_i32 = arith.constant 256 : i32
    %6 = arith.muli %arg1, %c256_i32 : i32
    %7 = tpu.assume_multiple %6, 256 : i32
    %c0_4 = arith.constant 0 : index
    %8 = arith.index_cast %7 : i32 to index
    %9 = vector.load %arg4[%c0_4, %8] : memref<1x256xf32, #tpu.memory_space<vmem>>, vector<1x256xf32>
    %10 = vector.broadcast %9 : vector<1x256xf32> to vector<16x256xf32>
    %11 = arith.addf %5, %10 : vector<16x256xf32>
    %12 = arith.negf %11 : vector<16x256xf32>
    %13 = math.exp %12 : vector<16x256xf32>
    %cst_5 = arith.constant 1.000000e+00 : f32
    %14 = vector.broadcast %cst_5 : f32 to vector<16x256xf32>
    %15 = arith.addf %14, %13 : vector<16x256xf32>
    %16 = arith.divf %14, %15 : vector<16x256xf32>
    %17 = arith.mulf %11, %16 : vector<16x256xf32>
    %c0_6 = arith.constant 0 : index
    %c0_7 = arith.constant 0 : index
    %18 = vector.load %arg8[%c0_6, %c0_7] : memref<16x128xf32, #tpu.memory_space<vmem>>, vector<16x128xf32>
    %c0_8 = arith.constant 0 : index
    %c0_9 = arith.constant 0 : index
    %19 = vector.load %arg5[%c0_8, %c0_9] : memref<256x128xf32, #tpu.memory_space<vmem>>, vector<256x128xf32>
    %cst_10 = arith.constant dense<0.000000e+00> : vector<16x128xf32>
    %20 = tpu.matmul %17, %19, %cst_10 {dimension_numbers = #tpu.dot_dimension_numbers<[1], [0], [0], [1], [0, 0, 1, 1], [], []>} : vector<16x256xf32>, vector<256x128xf32>, vector<16x128xf32> -> vector<16x128xf32>
    %21 = arith.addf %18, %20 : vector<16x128xf32>
    %c0_11 = arith.constant 0 : index
    %c0_12 = arith.constant 0 : index
    %22 = vector.load %arg8[%c0_11, %c0_12] : memref<16x128xf32, #tpu.memory_space<vmem>>, vector<16x128xf32>
    tpu.vector_store %arg8[%c0_11, %c0_12], %21 {strides = array<i32>} : memref<16x128xf32, #tpu.memory_space<vmem>>, vector<16x128xf32>,
    %c0_i32_13 = arith.constant 0 : i32
    %23 = arith.cmpi eq, %arg1, %c0_i32_13 : i32
    %24 = arith.extui %23 : i1 to i32
    %c0_i32_14 = arith.constant 0 : i32
    %25 = arith.cmpi ne, %24, %c0_i32_14 : i32
    scf.if %25 {
      %c0_15 = arith.constant 0 : index
      %c0_16 = arith.constant 0 : index
      %26 = vector.load %arg8[%c0_15, %c0_16] : memref<16x128xf32, #tpu.memory_space<vmem>>, vector<16x128xf32>
      %c0_17 = arith.constant 0 : index
      %c0_18 = arith.constant 0 : index
      %27 = vector.load %arg6[%c0_17, %c0_18] : memref<1x128xf32, #tpu.memory_space<vmem>>, vector<1x128xf32>
      %28 = vector.broadcast %27 : vector<1x128xf32> to vector<16x128xf32>
      %29 = arith.addf %26, %28 : vector<16x128xf32>
      %c0_19 = arith.constant 0 : index
      %c0_20 = arith.constant 0 : index
      %30 = vector.load %arg7[%c0_19, %c0_20] : memref<16x128xf32, #tpu.memory_space<vmem>>, vector<16x128xf32>
      tpu.vector_store %arg7[%c0_19, %c0_20], %29 {strides = array<i32>} : memref<16x128xf32, #tpu.memory_space<vmem>>, vector<16x128xf32>,
    } else {
    }
    return
  }
  func.func @transform_0(%arg0: i32, %arg1: i32) -> (i32, i32) {
    %c0_i32 = arith.constant 0 : i32
    %c0_i32_0 = arith.constant 0 : i32
    return %arg0, %c0_i32 : i32, i32
  }
  func.func @transform_1(%arg0: i32, %arg1: i32) -> (i32, i32) {
    %c0_i32 = arith.constant 0 : i32
    %c0_i32_0 = arith.constant 0 : i32
    return %c0_i32, %arg1 : i32, i32
  }
  func.func @transform_2(%arg0: i32, %arg1: i32) -> (i32, i32) {
    %c0_i32 = arith.constant 0 : i32
    %c0_i32_0 = arith.constant 0 : i32
    %c0_i32_1 = arith.constant 0 : i32
    return %c0_i32, %c0_i32_0 : i32, i32
  }
  func.func @transform_3(%arg0: i32, %arg1: i32) -> (i32, i32) {
    %c0_i32 = arith.constant 0 : i32
    %c0_i32_0 = arith.constant 0 : i32
    return %arg1, %c0_i32 : i32, i32
  }
  func.func @transform_4(%arg0: i32, %arg1: i32) -> (i32, i32) {
    %c0_i32 = arith.constant 0 : i32
    %c0_i32_0 = arith.constant 0 : i32
    %c0_i32_1 = arith.constant 0 : i32
    return %c0_i32, %c0_i32_0 : i32, i32
  }
  func.func @transform_5(%arg0: i32, %arg1: i32) -> (i32, i32) {
    %c0_i32 = arith.constant 0 : i32
    %c0_i32_0 = arith.constant 0 : i32
    return %arg0, %c0_i32 : i32, i32
  }
}

</mosaic_0001>

<llo_original>
// kernel: tpu_custom_call.1
$region0: #{tpu_custom_call.1}
  #allocation0 [shape = 'u32[]', space=smem, size = 0x4, offset = 0x4, fixed_abs, tag = 'smem constant byte address 0x4 - core index']
  #allocation1 [shape = 'u32[144,128]{1,0:T(1,128)}', space=vmem, size = 0x12000, scoped, tag = 'internal scratch']
  #allocation2 [shape = 'f32[16,128]{1,0:T(8,128)}', space=vmem, size = 0x2000, scoped, tag = 'scratch operand']
  %s0 = inlined_call_operand.hbm [shape: f32[16,128], index: 0, kind: input, shape index: {}]
  %s1 = inlined_call_operand.hbm [shape: f32[128,256], index: 1, kind: input, shape index: {}]
  %s2 = inlined_call_operand.vmem [shape: f32[1,256], index: 2, kind: input, shape index: {}]
  %s3 = inlined_call_operand.hbm [shape: f32[256,128], index: 3, kind: input, shape index: {}]
  %s4 = inlined_call_operand.vmem [shape: f32[1,128], index: 4, kind: input, shape index: {}]
  %s5 = inlined_call_operand.hbm [shape: f32[16,128], index: 5, kind: output, shape index: {}]
  %s6 = sld [smem:[#allocation0]]
  $region50: #{tpu_custom_call.1} parent=0
    _
  %s8 = ssub.s32 1, %s6
  %s9 = scalar_select 0, %s8, %s6
  $region1: #{tpu_custom_call.1} parent=0
    #allocation3 [shape = 'u8[8192]{0}', space=vmem, size = 0x2000, scoped, tag = 'input window, operand 0, single buffered']
    #allocation4 [shape = 's32[1]{0}', space=sflag, size = 0x4, scoped, tag = 'scoped memory for tpu_custom_call.1']
    #allocation5 [shape = 's32[1]{0}', space=sflag, size = 0x4, scoped, tag = 'scoped memory for tpu_custom_call.1']
    #allocation6 [shape = 'u8[131072]{0}', space=vmem, size = 0x20000, scoped, tag = 'input window, operand 1, single buffered']
    #allocation7 [shape = 's32[1]{0}', space=sflag, size = 0x4, scoped, tag = 'scoped memory for tpu_custom_call.1']
    #allocation8 [shape = 'u8[131072]{0}', space=vmem, size = 0x20000, scoped, tag = 'input window, operand 3, single buffered']
    #allocation9 [shape = 'u8[8192]{0}', space=vmem, size = 0x2000, scoped, tag = 'output window, operand 0, single buffered']
    %10 = vsyncpa [#allocation4], 0
    %11 = vsyncpa [#allocation7], 0
    %12 = vsyncpa [#allocation5], 0
    // Predicated region
    $region2: #{tpu_custom_call.1} parent=1 // pred_check
      _
    $region3: #{tpu_custom_call.1} parent=1 // pred_check_branch
      %14 = sbr.rel (0) target = $region5
    $region4: #{tpu_custom_call.1} parent=1 // pred_region
      %s16 = ssub.s32 256, 256
      %17 = vsyncadd [#allocation4], %s16
      %s18 = sshll.u32 [#allocation3], 4
      %s19 = int_to_ptr.vmem [resolvable:$true] %s18
      %24 = dma.hbm_to_vmem [thread:$0]  %s0, 256, %s19, [#allocation4], 128, 128, 8
    $region5: #{tpu_custom_call.1} parent=1 // pred_fallthru
      _
    // Predicated region
    $region6: #{tpu_custom_call.1} parent=1 // pred_check
      _
    $region7: #{tpu_custom_call.1} parent=1 // pred_check_branch
      %26 = sbr.rel (0) target = $region9
    $region8: #{tpu_custom_call.1} parent=1 // pred_region
      %s28 = ssub.s32 4096, 4096
      %29 = vsyncadd [#allocation7], %s28
      %s30 = sshll.u32 [#allocation6], 4
      %s31 = int_to_ptr.vmem [resolvable:$true] %s30
      %36 = dma.hbm_to_vmem [thread:$0]  %s1, 4096, %s31, [#allocation7], 256, 256, 16
    $region9: #{tpu_custom_call.1} parent=1 // pred_fallthru
      _
    // Predicated region
    $region10: #{tpu_custom_call.1} parent=1 // pred_check
      _
    $region11: #{tpu_custom_call.1} parent=1 // pred_check_branch
      %38 = sbr.rel (0) target = $region13
    $region12: #{tpu_custom_call.1} parent=1 // pred_region
      _
    $region13: #{tpu_custom_call.1} parent=1 // pred_fallthru
      _
    // Predicated region
    $region14: #{tpu_custom_call.1} parent=1 // pred_check
      _
    $region15: #{tpu_custom_call.1} parent=1 // pred_check_branch
      %40 = sbr.rel (0) target = $region17
    $region16: #{tpu_custom_call.1} parent=1 // pred_region
      %s42 = ssub.s32 4096, 4096
      %43 = vsyncadd [#allocation7], %s42
      %s44 = sshll.u32 [#allocation8], 4
      %s45 = int_to_ptr.vmem [resolvable:$true] %s44
      %50 = dma.hbm_to_vmem [thread:$0]  %s3, 4096, %s45, [#allocation7], 128, 128, 8
    $region17: #{tpu_custom_call.1} parent=1 // pred_fallthru
      _
    // Predicated region
    $region18: #{tpu_custom_call.1} parent=1 // pred_check
      _
    $region19: #{tpu_custom_call.1} parent=1 // pred_check_branch
      %52 = sbr.rel (0) target = $region21
    $region20: #{tpu_custom_call.1} parent=1 // pred_region
      _
    $region21: #{tpu_custom_call.1} parent=1 // pred_fallthru
      _
    // Predicated region
    $region22: #{tpu_custom_call.1} parent=1 // pred_check
      _
    $region23: #{tpu_custom_call.1} parent=1 // pred_check_branch
      %54 = sbr.rel (0) target = $region25
    $region24: #{tpu_custom_call.1} parent=1 // pred_region
      %55 = dma.done [#allocation4], 256
    $region25: #{tpu_custom_call.1} parent=1 // pred_fallthru
      _
    // Predicated region
    $region26: #{tpu_custom_call.1} parent=1 // pred_check
      _
    $region27: #{tpu_custom_call.1} parent=1 // pred_check_branch
      %57 = sbr.rel (0) target = $region29
    $region28: #{tpu_custom_call.1} parent=1 // pred_region
      %58 = dma.done [#allocation7], 4096
    $region29: #{tpu_custom_call.1} parent=1 // pred_fallthru
      _
    // Predicated region
    $region30: #{tpu_custom_call.1} parent=1 // pred_check
      _
    $region31: #{tpu_custom_call.1} parent=1 // pred_check_branch
      %60 = sbr.rel (0) target = $region33
    $region32: #{tpu_custom_call.1} parent=1 // pred_region
      %61 = dma.done [#allocation7], 4096
    $region33: #{tpu_custom_call.1} parent=1 // pred_fallthru
      _
    %p62 = scmp.eq.s32.totalorder 0, 0
    // Predicated region
    $region34: #{tpu_custom_call.1} parent=1 // pred_check
      %p63 = pneg %p62
    $region35: #{tpu_custom_call.1} parent=1 // pred_check_branch
      %65 = sbr.rel (%p63) target = $region37
    $region36: #{tpu_custom_call.1} parent=1 // pred_region
      %66 = vst [vmem:[#allocation2] sm:$0xff] 0.0
      %67 = vst [vmem:[#allocation2 + $0x8] sm:$0xff] 0.0
    $region37: #{tpu_custom_call.1} parent=1 // pred_fallthru
      _
    %v68 = vld [vmem:[#allocation3] sm:$0xff]
    %v69 = vld [vmem:[#allocation3 + $0x8] sm:$0xff]
    %v70 = vld [vmem:[#allocation6] sm:$0xff]
    %v71 = vld [vmem:[#allocation6 + $0x8] sm:$0xff]
    %v72 = vld [vmem:[#allocation6 + $0x10] sm:$0xff]
    %v73 = vld [vmem:[#allocation6 + $0x18] sm:$0xff]
    %v74 = vld [vmem:[#allocation6 + $0x20] sm:$0xff]
    %v75 = vld [vmem:[#allocation6 + $0x28] sm:$0xff]
    %v76 = vld [vmem:[#allocation6 + $0x30] sm:$0xff]
    %v77 = vld [vmem:[#allocation6 + $0x38] sm:$0xff]
    %v78 = vld [vmem:[#allocation6 + $0x40] sm:$0xff]
    %v79 = vld [vmem:[#allocation6 + $0x48] sm:$0xff]
    %v80 = vld [vmem:[#allocation6 + $0x50] sm:$0xff]
    %v81 = vld [vmem:[#allocation6 + $0x58] sm:$0xff]
    %v82 = vld [vmem:[#allocation6 + $0x60] sm:$0xff]
    %v83 = vld [vmem:[#allocation6 + $0x68] sm:$0xff]
    %v84 = vld [vmem:[#allocation6 + $0x70] sm:$0xff]
    %v85 = vld [vmem:[#allocation6 + $0x78] sm:$0xff]
    %v86 = vld [vmem:[#allocation6 + $0x80] sm:$0xff]
    %v87 = vld [vmem:[#allocation6 + $0x88] sm:$0xff]
    %v88 = vld [vmem:[#allocation6 + $0x90] sm:$0xff]
    %v89 = vld [vmem:[#allocation6 + $0x98] sm:$0xff]
    %v90 = vld [vmem:[#allocation6 + $0xa0] sm:$0xff]
    %v91 = vld [vmem:[#allocation6 + $0xa8] sm:$0xff]
    %v92 = vld [vmem:[#allocation6 + $0xb0] sm:$0xff]
    %v93 = vld [vmem:[#allocation6 + $0xb8] sm:$0xff]
    %v94 = vld [vmem:[#allocation6 + $0xc0] sm:$0xff]
    %v95 = vld [vmem:[#allocation6 + $0xc8] sm:$0xff]
    %v96 = vld [vmem:[#allocation6 + $0xd0] sm:$0xff]
    %v97 = vld [vmem:[#allocation6 + $0xd8] sm:$0xff]
    %v98 = vld [vmem:[#allocation6 + $0xe0] sm:$0xff]
    %v99 = vld [vmem:[#allocation6 + $0xe8] sm:$0xff]
    %v100 = vld [vmem:[#allocation6 + $0xf0] sm:$0xff]
    %v101 = vld [vmem:[#allocation6 + $0xf8] sm:$0xff]
    %s102 = smul.u32 0, 256
    %s103 = sshra.s32 %s102, 7
    %s104 = sand.u32 %s102, 127
    %s105 = scalar_lea.vmem %s2, %s103
    %v106 = vld [vmem:[%s105] sm:$0x3]
    %v108 = vlaneseq
    %v109 = vshrl.u32 %v108, 7
    %v110 = vsub.s32 0, %v109
    %v111 = vrot.slane %v106, %v110
    %v112 = vlaneseq
    %v113 = vshrl.u32 %v112, 7
    %v114 = vsub.s32 1, %v113
    %v115 = vrot.slane %v106, %v114
    %118 = vmatprep.subr.mxu0 %v101
    %119 = vmatpush1.msra.mxu0 %v100
    %120 = vmatprep.subr.mxu0 %v99
    %121 = vmatpush1.msra.mxu0 %v98
    %122 = vmatprep.subr.mxu0 %v97
    %123 = vmatpush1.msra.mxu0 %v96
    %124 = vmatprep.subr.mxu0 %v95
    %125 = vmatpush1.msra.mxu0 %v94
    %126 = vmatprep.subr.mxu0 %v93
    %127 = vmatpush1.msra.mxu0 %v92
    %128 = vmatprep.subr.mxu0 %v91
    %129 = vmatpush1.msra.mxu0 %v90
    %130 = vmatprep.subr.mxu0 %v89
    %131 = vmatpush1.msra.mxu0 %v88
    %132 = vmatprep.subr.mxu0 %v87
    %133 = vmatpush1.msra.mxu0 %v86
    %134 = vmatprep.subr.mxu0 %v85
    %135 = vmatpush1.msra.mxu0 %v84
    %136 = vmatprep.subr.mxu0 %v83
    %137 = vmatpush1.msra.mxu0 %v82
    %138 = vmatprep.subr.mxu0 %v81
    %139 = vmatpush1.msra.mxu0 %v80
    %140 = vmatprep.subr.mxu0 %v79
    %141 = vmatpush1.msra.mxu0 %v78
    %142 = vmatprep.subr.mxu0 %v77
    %143 = vmatpush1.msra.mxu0 %v76
    %144 = vmatprep.subr.mxu0 %v75
    %145 = vmatpush1.msra.mxu0 %v74
    %146 = vmatprep.subr.mxu0 %v73
    %147 = vmatpush1.msra.mxu0 %v72
    %148 = vmatprep.subr.mxu0 %v71
    %149 = vmatpush1.msra.mxu0 %v70
    %150 = vmatprep.subr.mxu0 0.0
    %151 = vmatpush2.msra.mxu0 0.0
    %152 = vmatprep.subr.mxu0 0.0
    %153 = vmatpush2.msra.mxu0 0.0
    %154 = vmatprep.subr.mxu0 0.0
    %155 = vmatpush2.msra.mxu0 0.0
    %156 = vmatprep.subr.mxu0 0.0
    %157 = vmatpush2.msra.mxu0 0.0
    %158 = vmatprep.subr.mxu0 0.0
    %159 = vmatpush2.msra.mxu0 0.0
    %160 = vmatprep.subr.mxu0 0.0
    %161 = vmatpush2.msra.mxu0 0.0
    %162 = vmatprep.subr.mxu0 0.0
    %163 = vmatpush2.msra.mxu0 0.0
    %164 = vmatprep.subr.mxu0 0.0
    %165 = vmatpush2.msra.mxu0 0.0
    %166 = vmatprep.subr.mxu0 0.0
    %167 = vmatpush2.msra.mxu0 0.0
    %168 = vmatprep.subr.mxu0 0.0
    %169 = vmatpush2.msra.mxu0 0.0
    %170 = vmatprep.subr.mxu0 0.0
    %171 = vmatpush2.msra.mxu0 0.0
    %172 = vmatprep.subr.mxu0 0.0
    %173 = vmatpush2.msra.mxu0 0.0
    %174 = vmatprep.subr.mxu0 0.0
    %175 = vmatpush2.msra.mxu0 0.0
    %176 = vmatprep.subr.mxu0 0.0
    %177 = vmatpush2.msra.mxu0 0.0
    %178 = vmatprep.subr.mxu0 0.0
    %179 = vmatpush2.msra.mxu0 0.0
    %180 = vmatprep.subr.mxu0 0.0
    %181 = vmatpush2.msra.mxu0 0.0
    %182 = vmatprep.mubr.f32.mxu0 0.0
    %183 = vmatmul.mubr.f32.gmra.mxu0 %v68
    %v184 = vpop.f32.mrf.mxu0
    %v185 = vadd.f32 %v111, %v184
    %v186 = vpop.f32.mrf.mxu0
    %v187 = vadd.f32 %v115, %v186
    %188 = vmatprep.mubr.f32.mxu0 0.0
    %189 = vmatmul.mubr.f32.gmra.mxu0 %v69
    %v190 = vpop.f32.mrf.mxu0
    %v191 = vadd.f32 %v111, %v190
    %v192 = vpop.f32.mrf.mxu0
    %v193 = vadd.f32 %v115, %v192
    %194 = vdwg.mxu0
    %v195 = vxor.u32 %v185, 2147483648
    %v196 = vxor.u32 %v187, 2147483648
    %v197 = vxor.u32 %v191, 2147483648
    %v198 = vxor.u32 %v193, 2147483648
    %v199 = vmul.f32 %v195, 1.442695
    %v200 = vpow.pop %v199
    %v201 = vmul.f32 %v196, 1.442695
    %v202 = vpow.pop %v201
    %v203 = vmul.f32 %v197, 1.442695
    %v204 = vpow.pop %v203
    %v205 = vmul.f32 %v198, 1.442695
    %v206 = vpow.pop %v205
    %v207 = vadd.f32 %v200, 1.0
    %v208 = vadd.f32 %v202, 1.0
    %v209 = vadd.f32 %v204, 1.0
    %v210 = vadd.f32 %v206, 1.0
    %v211 = vrcp.pop %v207
    %v212 = vmul.f32 1.0, %v211
    %v213 = vrcp.pop %v208
    %v214 = vmul.f32 1.0, %v213
    %v215 = vrcp.pop %v209
    %v216 = vmul.f32 1.0, %v215
    %v217 = vrcp.pop %v210
    %v218 = vmul.f32 1.0, %v217
    %v219 = vmul.f32 %v185, %v212
    %v220 = vmul.f32 %v187, %v214
    %v221 = vmul.f32 %v191, %v216
    %v222 = vmul.f32 %v193, %v218
    %v223 = vld [vmem:[#allocation2] sm:$0xff]
    %v224 = vld [vmem:[#allocation2 + $0x8] sm:$0xff]
    %v225 = vld [vmem:[#allocation8] sm:$0xff]
    %v226 = vld [vmem:[#allocation8 + $0x8] sm:$0xff]
    %v227 = vld [vmem:[#allocation8 + $0x10] sm:$0xff]
    %v228 = vld [vmem:[#allocation8 + $0x18] sm:$0xff]
    %v229 = vld [vmem:[#allocation8 + $0x20] sm:$0xff]
    %v230 = vld [vmem:[#allocation8 + $0x28] sm:$0xff]
    %v231 = vld [vmem:[#allocation8 + $0x30] sm:$0xff]
    %v232 = vld [vmem:[#allocation8 + $0x38] sm:$0xff]
    %v233 = vld [vmem:[#allocation8 + $0x40] sm:$0xff]
    %v234 = vld [vmem:[#allocation8 + $0x48] sm:$0xff]
    %v235 = vld [vmem:[#allocation8 + $0x50] sm:$0xff]
    %v236 = vld [vmem:[#allocation8 + $0x58] sm:$0xff]
    %v237 = vld [vmem:[#allocation8 + $0x60] sm:$0xff]
    %v238 = vld [vmem:[#allocation8 + $0x68] sm:$0xff]
    %v239 = vld [vmem:[#allocation8 + $0x70] sm:$0xff]
    %v240 = vld [vmem:[#allocation8 + $0x78] sm:$0xff]
    %v241 = vld [vmem:[#allocation8 + $0x80] sm:$0xff]
    %v242 = vld [vmem:[#allocation8 + $0x88] sm:$0xff]
    %v243 = vld [vmem:[#allocation8 + $0x90] sm:$0xff]
    %v244 = vld [vmem:[#allocation8 + $0x98] sm:$0xff]
    %v245 = vld [vmem:[#allocation8 + $0xa0] sm:$0xff]
    %v246 = vld [vmem:[#allocation8 + $0xa8] sm:$0xff]
    %v247 = vld [vmem:[#allocation8 + $0xb0] sm:$0xff]
    %v248 = vld [vmem:[#allocation8 + $0xb8] sm:$0xff]
    %v249 = vld [vmem:[#allocation8 + $0xc0] sm:$0xff]
    %v250 = vld [vmem:[#allocation8 + $0xc8] sm:$0xff]
    %v251 = vld [vmem:[#allocation8 + $0xd0] sm:$0xff]
    %v252 = vld [vmem:[#allocation8 + $0xd8] sm:$0xff]
    %v253 = vld [vmem:[#allocation8 + $0xe0] sm:$0xff]
    %v254 = vld [vmem:[#allocation8 + $0xe8] sm:$0xff]
    %v255 = vld [vmem:[#allocation8 + $0xf0] sm:$0xff]
    %v256 = vld [vmem:[#allocation8 + $0xf8] sm:$0xff]
    %257 = vmatprep.subr.mxu0 0.0
    %258 = vmatpush1.msra.mxu0 %v240
    %259 = vmatprep.subr.mxu0 0.0
    %260 = vmatpush1.msra.mxu0 %v239
    %261 = vmatprep.subr.mxu0 0.0
    %262 = vmatpush1.msra.mxu0 %v238
    %263 = vmatprep.subr.mxu0 0.0
    %264 = vmatpush1.msra.mxu0 %v237
    %265 = vmatprep.subr.mxu0 0.0
    %266 = vmatpush1.msra.mxu0 %v236
    %267 = vmatprep.subr.mxu0 0.0
    %268 = vmatpush1.msra.mxu0 %v235
    %269 = vmatprep.subr.mxu0 0.0
    %270 = vmatpush1.msra.mxu0 %v234
    %271 = vmatprep.subr.mxu0 0.0
    %272 = vmatpush1.msra.mxu0 %v233
    %273 = vmatprep.subr.mxu0 0.0
    %274 = vmatpush1.msra.mxu0 %v232
    %275 = vmatprep.subr.mxu0 0.0
    %276 = vmatpush1.msra.mxu0 %v231
    %277 = vmatprep.subr.mxu0 0.0
    %278 = vmatpush1.msra.mxu0 %v230
    %279 = vmatprep.subr.mxu0 0.0
    %280 = vmatpush1.msra.mxu0 %v229
    %281 = vmatprep.subr.mxu0 0.0
    %282 = vmatpush1.msra.mxu0 %v228
    %283 = vmatprep.subr.mxu0 0.0
    %284 = vmatpush1.msra.mxu0 %v227
    %285 = vmatprep.subr.mxu0 0.0
    %286 = vmatpush1.msra.mxu0 %v226
    %287 = vmatprep.subr.mxu0 0.0
    %288 = vmatpush1.msra.mxu0 %v225
    %289 = vmatprep.subr.mxu0 0.0
    %290 = vmatpush2.msra.mxu0 %v256
    %291 = vmatprep.subr.mxu0 0.0
    %292 = vmatpush2.msra.mxu0 %v255
    %293 = vmatprep.subr.mxu0 0.0
    %294 = vmatpush2.msra.mxu0 %v254
    %295 = vmatprep.subr.mxu0 0.0
    %296 = vmatpush2.msra.mxu0 %v253
    %297 = vmatprep.subr.mxu0 0.0
    %298 = vmatpush2.msra.mxu0 %v252
    %299 = vmatprep.subr.mxu0 0.0
    %300 = vmatpush2.msra.mxu0 %v251
    %301 = vmatprep.subr.mxu0 0.0
    %302 = vmatpush2.msra.mxu0 %v250
    %303 = vmatprep.subr.mxu0 0.0
    %304 = vmatpush2.msra.mxu0 %v249
    %305 = vmatprep.subr.mxu0 0.0
    %306 = vmatpush2.msra.mxu0 %v248
    %307 = vmatprep.subr.mxu0 0.0
    %308 = vmatpush2.msra.mxu0 %v247
    %309 = vmatprep.subr.mxu0 0.0
    %310 = vmatpush2.msra.mxu0 %v246
    %311 = vmatprep.subr.mxu0 0.0
    %312 = vmatpush2.msra.mxu0 %v245
    %313 = vmatprep.subr.mxu0 0.0
    %314 = vmatpush2.msra.mxu0 %v244
    %315 = vmatprep.subr.mxu0 0.0
    %316 = vmatpush2.msra.mxu0 %v243
    %317 = vmatprep.subr.mxu0 0.0
    %318 = vmatpush2.msra.mxu0 %v242
    %319 = vmatprep.subr.mxu0 0.0
    %320 = vmatpush2.msra.mxu0 %v241
    %321 = vmatprep.mubr.f32.mxu0 %v220
    %322 = vmatmul.mubr.f32.gmra.mxu0 %v219
    %v323 = vpop.f32.mrf.mxu0
    %v324 = vadd.f32 0.0, %v323
    %v325 = vpop.f32.mrf.mxu0
    %326 = vmatprep.mubr.f32.mxu0 %v222
    %327 = vmatmul.mubr.f32.gmra.mxu0 %v221
    %v328 = vpop.f32.mrf.mxu0
    %v329 = vadd.f32 0.0, %v328
    %v330 = vpop.f32.mrf.mxu0
    %331 = vdwg.mxu0
    %v332 = vadd.f32 %v223, %v324
    %v333 = vadd.f32 %v224, %v329
    %334 = vst [vmem:[#allocation2] sm:$0xff] %v332
    %335 = vst [vmem:[#allocation2 + $0x8] sm:$0xff] %v333
    // Predicated region
    $region38: #{tpu_custom_call.1} parent=1 // pred_check
      %p336 = pneg %p62
    $region39: #{tpu_custom_call.1} parent=1 // pred_check_branch
      %338 = sbr.rel (%p336) target = $region41
    $region40: #{tpu_custom_call.1} parent=1 // pred_region
      %v339 = vld [vmem:[#allocation2] sm:$0xff]
      %v340 = vld [vmem:[#allocation2 + $0x8] sm:$0xff]
      %v341 = vld [vmem:[%s4] sm:$0x1]
      %v343 = vlaneseq
      %v344 = vshrl.u32 %v343, 7
      %v345 = vsub.s32 0, %v344
      %v346 = vrot.slane %v341, %v345
      %v348 = vadd.f32 %v339, %v346
      %v349 = vadd.f32 %v340, %v346
      %350 = vst [vmem:[#allocation9] sm:$0xff] %v348
      %351 = vst [vmem:[#allocation9 + $0x8] sm:$0xff] %v349
    $region41: #{tpu_custom_call.1} parent=1 // pred_fallthru
      _
    // Predicated region
    $region42: #{tpu_custom_call.1} parent=1 // pred_check
      _
    $region43: #{tpu_custom_call.1} parent=1 // pred_check_branch
      %353 = sbr.rel (0) target = $region45
    $region44: #{tpu_custom_call.1} parent=1 // pred_region
      %s355 = ssub.s32 256, 256
      %356 = vsyncadd [#allocation5], %s355
      %s357 = sshll.u32 [#allocation9], 4
      %s358 = int_to_ptr.vmem [resolvable:$true] %s357
      %363 = dma.vmem_to_hbm [thread:$0]  %s358, 256, %s5, [#allocation5], 128, 128, 8
    $region45: #{tpu_custom_call.1} parent=1 // pred_fallthru
      _
    // Predicated region
    $region46: #{tpu_custom_call.1} parent=1 // pred_check
      _
    $region47: #{tpu_custom_call.1} parent=1 // pred_check_branch
      %365 = sbr.rel (0) target = $region49
    $region48: #{tpu_custom_call.1} parent=1 // pred_region
      %366 = dma.done [#allocation5], 256
    $region49: #{tpu_custom_call.1} parent=1 // pred_fallthru
      _
    %367 = vsyncpa [#allocation4], 1
    %368 = vsyncpa [#allocation7], 1
    %369 = vsyncpa [#allocation5], 1

</llo_original>
